<compile_context>
chip_gen: v5e
topology: v5e:2x2
jax: 0.10.0
libtpu: 0.0.40
codegen_flags: <defaults>
</compile_context>

<pallas_src>
import math
import functools

import jax
import jax.numpy as jnp
from jax import lax
from jax.experimental import pallas as pl
from jax.experimental.pallas import tpu as pltpu

LN_EPS = 1e-5   # nn.LayerNorm default
_LANE = 128
_SUBLANE = 8


def _round_up(x, m):
    return ((x + m - 1) // m) * m


def _cdiv(a, b):
    return -(-a // b)


def _vmem_budget_bytes():
    """Per-generation safe VMEM ceiling (leave headroom for compiler scratch)."""
    try:
        cap = int(pltpu.get_tpu_info().vmem_capacity_bytes)
    except Exception:
        cap = 128 << 20
    if cap <= (64 << 20):
        # v7x-class: 64 MiB physical -> ask for ~48 MiB
        return (cap * 3) // 4
    # v5e / v6e: 128 MiB physical (scoped default is only 16/32 MiB)
    return min((cap * 3) // 4, 100 << 20)


def _has_megacore():
    """True on parts with 2 TensorCores per chip (v4 / v5p / v7x)."""
    try:
        kind = jax.devices()[0].device_kind.lower()
    except Exception:
        return False
    if "lite" in kind or "v5e" in kind or "v6e" in kind:
        return False
    return any(tok in kind for tok in ("v4", "v5p", "v5 p", "v7"))


# ---------------------------------------------------------------------------
# Kernel
# ---------------------------------------------------------------------------
def _decoder_kernel(x_ref, w1_ref, lnp_ref, w2_ref, b2_ref, o_ref, *,
                    hid_actual, mask_needed, approximate_gelu):
    # --- Linear 1: [TB, Din_p] @ [Din_p, H_p]  (MXU, f32 accumulate) ---
    h = jnp.dot(x_ref[...], w1_ref[...], preferred_element_type=jnp.float32)
    h = h + lnp_ref[0:1, :]                            # b1 (padded cols are 0)

    # --- LayerNorm over the REAL hidden width (padded columns excluded) ---
    inv_n = 1.0 / hid_actual
    mean = jnp.sum(h, axis=-1, keepdims=True) * inv_n  # padded cols of h are 0
    centered = h - mean
    if mask_needed:
        centered = centered * lnp_ref[3:4, :]          # pad mask row: one vmul
    var = jnp.sum(centered * centered, axis=-1, keepdims=True) * inv_n
    h_norm = centered * lax.rsqrt(var + LN_EPS)
    h_norm = h_norm * lnp_ref[1:2, :] + lnp_ref[2:3, :]  # gamma (0 on pad), beta

    # --- GELU ---
    if approximate_gelu:
        # tanh approximation -> EUP (idle bundle slot) instead of long erf poly
        c = math.sqrt(2.0 / math.pi)
        a = 0.5 * h_norm * (1.0 + jnp.tanh(c * (h_norm + 0.044715 * h_norm * h_norm * h_norm)))
    else:
        # exact erf formulation, matches nn.GELU()
        a = 0.5 * h_norm * (1.0 + lax.erf(h_norm * (1.0 / math.sqrt(2.0))))
    # --- Dropout: identity (inference) ---

    # --- Linear 2: [TB, H_p] @ [H_p, Dout_p]  (MXU, f32 accumulate) ---
    y = jnp.dot(a.astype(w2_ref.dtype), w2_ref[...],
                preferred_element_type=jnp.float32)
    y = y + b2_ref[...]
    o_ref[...] = y.astype(o_ref.dtype)


# ---------------------------------------------------------------------------
# Wrapper
# ---------------------------------------------------------------------------
def prepare_decoder_params(params, *, matmul_dtype=jnp.bfloat16):
    """Pad/cast weights ONCE (hoisted out of the per-call path).

    Weights are stored [in, out] (transposed w.r.t. nn.Linear's [out, in]).
    Reuse the returned dict across calls to avoid re-reading/re-writing
    W1/W2 in HBM on every forward.
    """
    w1, b1, ln_g, ln_b, w2, b2 = (params["w1"], params["b1"], params["ln_g"],
                                  params["ln_b"], params["w2"], params["b2"])
    d_in, hid = w1.shape
    d_out = w2.shape[1]
    d_in_p = _round_up(d_in, _LANE)
    hid_p = _round_up(hid, _LANE)
    d_out_p = _round_up(d_out, _LANE)
    mm_dtype = jnp.dtype(matmul_dtype)

    w1_p = jnp.zeros((d_in_p, hid_p), mm_dtype).at[:d_in, :hid].set(w1.astype(mm_dtype))
    w2_p = jnp.zeros((hid_p, d_out_p), mm_dtype).at[:hid, :d_out].set(w2.astype(mm_dtype))
    # b1 / LN gamma / LN beta / LN pad-mask stacked in one lane-dense (4, hid_p) slab.
    lnp = jnp.zeros((4, hid_p), jnp.float32)
    lnp = lnp.at[0, :hid].set(b1.astype(jnp.float32))
    lnp = lnp.at[1, :hid].set(ln_g.astype(jnp.float32))
    lnp = lnp.at[2, :hid].set(ln_b.astype(jnp.float32))
    lnp = lnp.at[3, :hid].set(1.0)                    # mask: 1 on real cols, 0 on pad
    b2_p = jnp.zeros((1, d_out_p), jnp.float32).at[0, :d_out].set(b2.astype(jnp.float32))

    return {"w1_p": w1_p, "lnp": lnp, "w2_p": w2_p, "b2_p": b2_p,
            "d_in": d_in, "hid": hid, "d_out": d_out}


def _choose_block_b(B, d_in_p, hid_p, d_out_p, mm_bytes, out_bytes,
                    weight_bytes, wbuf_mult, budget, multi_tc):
    # bf16 packs 16 rows per vreg -> use 16-row granularity for narrow dtypes.
    gran = 16 if mm_bytes <= 2 else _SUBLANE
    bb = max(gran, min(512, _round_up(B, gran)))

    def est(b):
        return (2 * b * d_in_p * mm_bytes            # double-buffered x tiles
                + 2 * b * d_out_p * out_bytes        # double-buffered out tiles
                + wbuf_mult * weight_bytes           # resident weight/bias slabs
                + 6 * b * hid_p * 4                  # live f32 intermediates
                + (2 << 20))                         # headroom

    # Shrink the batch tile (never the feature dims) until we fit the budget.
    while bb > gran and est(bb) > budget:
        bb = max(gran, _round_up(bb // 2, gran))

    # Only on 2-TC (megacore) parts: prefer an even step count so both cores
    # get balanced work.  Single-TC chips keep one big tile (grid is serial).
    if multi_tc and B > gran:
        steps = _cdiv(B, bb)
        if steps % 2 == 1:
            bb = max(gran, _round_up(_cdiv(B, steps + 1), gran))
    return bb


def wubu_to_deepseek_r1_decoder(x, params, *, block_b=None,
                                matmul_dtype=jnp.bfloat16,
                                approximate_gelu=False,
                                out_dtype=None,
                                single_buffer_weights=None):
    """x: [B, wubu_tangent_dim] -> [B, source_embedding_dim]. Fused MLP decoder.

    `params` may be the raw weight dict or the output of prepare_decoder_params
    (preferred for repeated calls: weights are padded/cast only once).
    """
    if "w1_p" not in params:
        params = prepare_decoder_params(params, matmul_dtype=matmul_dtype)
    w1_p, lnp, w2_p, b2_p = params["w1_p"], params["lnp"], params["w2_p"], params["b2_p"]
    d_in, hid, d_out = params["d_in"], params["hid"], params["d_out"]

    B = x.shape[0]
    d_in_p, hid_p = w1_p.shape
    d_out_p = w2_p.shape[1]
    mm_dtype = w1_p.dtype
    out_dtype = jnp.dtype(out_dtype) if out_dtype is not None else x.dtype
    mm_bytes = jnp.dtype(mm_dtype).itemsize
    out_bytes = jnp.dtype(out_dtype).itemsize

    weight_bytes = ((d_in_p * hid_p + hid_p * d_out_p) * mm_bytes
                    + (4 * hid_p + d_out_p) * 4)
    if single_buffer_weights is None:
        # Only bother when the resident slabs are big enough for the VMEM
        # saving to matter (keeps the small-model path maximally simple).
        single_buffer_weights = weight_bytes > (8 << 20)
    wbuf_mult = 1 if single_buffer_weights else 2

    budget = _vmem_budget_bytes()
    multi_tc = _has_megacore()
    # TODO(synk): if wbuf_mult*weight_bytes alone approaches `budget` (very large
    # hid), add a hid-tiled "arbitrary" grid axis with a pl.when-guarded f32
    # accumulator instead of relying on the VMEM limit.

    if block_b is None:
        block_b = _choose_block_b(B, d_in_p, hid_p, d_out_p, mm_bytes, out_bytes,
                                  weight_bytes, wbuf_mult, budget, multi_tc)
    assert block_b % _SUBLANE == 0, "block_b must be a multiple of 8"

    B_p = _round_up(B, block_b)
    grid = (B_p // block_b,)

    # ---- pad x only when actually required (no-op pass otherwise) ----
    if B_p != B or d_in_p != d_in:
        x_p = jnp.zeros((B_p, d_in_p), mm_dtype).at[:B, :d_in].set(x.astype(mm_dtype))
    else:
        x_p = x.astype(mm_dtype)

    # ---- BlockSpecs: streamed x/out tiles, resident weight slabs ----
    def _const_spec(shape):
        if single_buffer_weights:
            # grid-invariant -> one buffer is enough; halves weight VMEM.
            return pl.BlockSpec(shape, lambda i: tuple(0 for _ in shape),
                                pipeline_mode=pl.Buffered(1))
        return pl.BlockSpec(shape, lambda i: tuple(0 for _ in shape))

    kernel = functools.partial(_decoder_kernel,
                               hid_actual=hid,
                               mask_needed=(hid_p != hid),
                               approximate_gelu=approximate_gelu)

    out_p = pl.pallas_call(
        kernel,
        out_shape=jax.ShapeDtypeStruct((B_p, d_out_p), out_dtype),
        grid_spec=pltpu.PrefetchScalarGridSpec(
            num_scalar_prefetch=0,
            grid=grid,
            in_specs=[
                pl.BlockSpec((block_b, d_in_p), lambda i: (i, 0)),   # x tile
                _const_spec((d_in_p, hid_p)),                        # W1 (resident)
                _const_spec((4, hid_p)),                             # [b1; gamma; beta; mask]
                _const_spec((hid_p, d_out_p)),                       # W2 (resident)
                _const_spec((1, d_out_p)),                           # b2
            ],
            out_specs=pl.BlockSpec((block_b, d_out_p), lambda i: (i, 0)),
        ),
        compiler_params=pltpu.CompilerParams(
            dimension_semantics=("parallel",),
            vmem_limit_bytes=int(budget)),
    )(x_p, w1_p, lnp, w2_p, b2_p)

    if B_p != B or d_out_p != d_out:
        return out_p[:B, :d_out]
    return out_p


# ---------------------------------------------------------------------------
# Param init + pure-JAX reference (eval-mode semantics)
# ---------------------------------------------------------------------------
def init_params(key, wubu_tangent_dim, source_embedding_dim,
                mlp_hidden_dim_ratio=2.0):
    """Mirror init_weights_general: xavier_uniform(gain=calculate_gain('relu')),
    zero Linear biases, LayerNorm weight=1 / bias=0.  Weights stored [in, out]."""
    hid = int(wubu_tangent_dim * mlp_hidden_dim_ratio)
    gain = math.sqrt(2.0)  # calculate_gain('relu')

    def xavier_uniform(k, fan_in, fan_out):
        bound = gain * math.sqrt(6.0 / (fan_in + fan_out))
        return jax.random.uniform(k, (fan_in, fan_out), jnp.float32,
                                  minval=-bound, maxval=bound)

    k1, k2 = jax.random.split(key)
    return {
        "w1": xavier_uniform(k1, wubu_tangent_dim, hid),
        "b1": jnp.zeros((hid,), jnp.float32),
        "ln_g": jnp.ones((hid,), jnp.float32),
        "ln_b": jnp.zeros((hid,), jnp.float32),
        "w2": xavier_uniform(k2, hid, source_embedding_dim),
        "b2": jnp.zeros((source_embedding_dim,), jnp.float32),
    }


def reference_forward(x, params):
    """Pure-JAX f32 reference of the same forward pass (eval mode)."""
    h = jnp.dot(x, params["w1"], precision=lax.Precision.HIGHEST) + params["b1"]
    mean = jnp.mean(h, axis=-1, keepdims=True)
    var = jnp.mean((h - mean) ** 2, axis=-1, keepdims=True)
    h = (h - mean) / jnp.sqrt(var + LN_EPS)
    h = h * params["ln_g"] + params["ln_b"]
    h = 0.5 * h * (1.0 + lax.erf(h / math.sqrt(2.0)))
    return jnp.dot(h, params["w2"], precision=lax.Precision.HIGHEST) + params["b2"]


if __name__ == "__main__":
    # Small shapes implied by the module: batch of tangent vectors.
    B = 16
    WUBU_TANGENT_DIM = 32          # input dim; hid = 64
    SOURCE_EMBEDDING_DIM = 48      # output dim

    key = jax.random.PRNGKey(0)
    kx, kp = jax.random.split(key)
    x = jax.random.normal(kx, (B, WUBU_TANGENT_DIM), jnp.float32)
    params = init_params(kp, WUBU_TANGENT_DIM, SOURCE_EMBEDDING_DIM)

    y_ref = reference_forward(x, params)

    # Padded/cast weights hoisted out of the call path (reused across calls).
    prepared_bf16 = prepare_decoder_params(params, matmul_dtype=jnp.bfloat16)

    # Default fast path: bf16 MXU operands, f32 accumulation / LN / GELU.
    y = wubu_to_deepseek_r1_decoder(x, prepared_bf16)
    y = jax.block_until_ready(y)
    assert y.shape == (B, SOURCE_EMBEDDING_DIM), y.shape
    assert jnp.allclose(y, y_ref, atol=5e-2, rtol=5e-2), \
        float(jnp.max(jnp.abs(y - y_ref)))

    # Second call with the same prepared params (exercises the cached path).
    y_again = jax.block_until_ready(wubu_to_deepseek_r1_decoder(x, prepared_bf16))
    assert jnp.allclose(y_again, y, atol=0, rtol=0)

    # Full-f32 path: tighter check of the fused math itself.
    y32 = wubu_to_deepseek_r1_decoder(x, params, matmul_dtype=jnp.float32)
    y32 = jax.block_until_ready(y32)
    assert jnp.allclose(y32, y_ref, atol=2e-3, rtol=2e-3), \
        float(jnp.max(jnp.abs(y32 - y_ref)))

    # Optional tanh-approx GELU path (EUP instead of erf polynomial); loose tol.
    y_approx = wubu_to_deepseek_r1_decoder(x, prepared_bf16, approximate_gelu=True)
    y_approx = jax.block_until_ready(y_approx)
    assert jnp.allclose(y_approx, y_ref, atol=1e-1, rtol=1e-1), \
        float(jnp.max(jnp.abs(y_approx - y_ref)))

    print("KERNEL_OK")
</pallas_src>

<mosaic_0001>
module attributes {stable_mosaic.version = 11 : i64} {
  func.func @_decoder_kernel(%arg0: i32, %arg1: memref<16x128xbf16, #tpu.memory_space<vmem>>, %arg2: memref<128x128xbf16, #tpu.memory_space<vmem>>, %arg3: memref<4x128xf32, #tpu.memory_space<vmem>>, %arg4: memref<128x128xbf16, #tpu.memory_space<vmem>>, %arg5: memref<1x128xf32, #tpu.memory_space<vmem>>, %arg6: memref<16x128xf32, #tpu.memory_space<vmem>>) attributes {dimension_semantics = [#tpu.dimension_semantics<parallel>], iteration_bounds = array<i64: 1>, scalar_prefetch = 0 : i64, scratch_operands = 0 : i64, tpu.core_type = #tpu.core_type<tc>, window_params = [{transform_indices = @transform_0, window_bounds = array<i64: 16, 128>}, {pipeline_mode = #tpu.pipeline_mode<synchronous>, transform_indices = @transform_1, window_bounds = array<i64: 128, 128>}, {pipeline_mode = #tpu.pipeline_mode<synchronous>, transform_indices = @transform_2, window_bounds = array<i64: 4, 128>}, {pipeline_mode = #tpu.pipeline_mode<synchronous>, transform_indices = @transform_3, window_bounds = array<i64: 128, 128>}, {pipeline_mode = #tpu.pipeline_mode<synchronous>, transform_indices = @transform_4, window_bounds = array<i64: 1, 128>}, {transform_indices = @transform_5, window_bounds = array<i64: 16, 128>}]} {
    %c0 = arith.constant 0 : index
    %c0_0 = arith.constant 0 : index
    %0 = vector.load %arg1[%c0, %c0_0] : memref<16x128xbf16, #tpu.memory_space<vmem>>, vector<16x128xbf16>
    %c0_1 = arith.constant 0 : index
    %c0_2 = arith.constant 0 : index
    %1 = vector.load %arg2[%c0_1, %c0_2] : memref<128x128xbf16, #tpu.memory_space<vmem>>, vector<128x128xbf16>
    %cst = arith.constant dense<0.000000e+00> : vector<16x128xf32>
    %2 = tpu.matmul %0, %1, %cst {dimension_numbers = #tpu.dot_dimension_numbers<[1], [0], [0], [1], [0, 0, 1, 1], [], []>} : vector<16x128xbf16>, vector<128x128xbf16>, vector<16x128xf32> -> vector<16x128xf32>
    %c0_3 = arith.constant 0 : index
    %c0_4 = arith.constant 0 : index
    %3 = vector.load %arg3[%c0_3, %c0_4] : memref<4x128xf32, #tpu.memory_space<vmem>>, vector<1x128xf32>
    %4 = vector.broadcast %3 : vector<1x128xf32> to vector<16x128xf32>
    %5 = arith.addf %2, %4 : vector<16x128xf32>
    %cst_5 = arith.constant dense<0.000000e+00> : vector<16xf32>
    %6 = vector.multi_reduction <add>, %5, %cst_5 [1] : vector<16x128xf32> to vector<16xf32>
    %7 = vector.shape_cast %6 : vector<16xf32> to vector<16x1xf32>
    %cst_6 = arith.constant 1.562500e-02 : f32
    %8 = vector.broadcast %cst_6 : f32 to vector<16x1xf32>
    %9 = arith.mulf %7, %8 : vector<16x1xf32>
    %10 = vector.broadcast %9 : vector<16x1xf32> to vector<16x128xf32>
    %11 = arith.subf %5, %10 : vector<16x128xf32>
    %c3 = arith.constant 3 : index
    %c0_7 = arith.constant 0 : index
    %12 = vector.load %arg3[%c3, %c0_7] : memref<4x128xf32, #tpu.memory_space<vmem>>, vector<1x128xf32>
    %13 = vector.broadcast %12 : vector<1x128xf32> to vector<16x128xf32>
    %14 = arith.mulf %11, %13 : vector<16x128xf32>
    %15 = arith.mulf %14, %14 : vector<16x128xf32>
    %cst_8 = arith.constant dense<0.000000e+00> : vector<16xf32>
    %16 = vector.multi_reduction <add>, %15, %cst_8 [1] : vector<16x128xf32> to vector<16xf32>
    %17 = vector.shape_cast %16 : vector<16xf32> to vector<16x1xf32>
    %cst_9 = arith.constant 1.562500e-02 : f32
    %18 = vector.broadcast %cst_9 : f32 to vector<16x1xf32>
    %19 = arith.mulf %17, %18 : vector<16x1xf32>
    %cst_10 = arith.constant 9.99999974E-6 : f32
    %20 = vector.broadcast %cst_10 : f32 to vector<16x1xf32>
    %21 = arith.addf %19, %20 : vector<16x1xf32>
    %22 = math.rsqrt %21 : vector<16x1xf32>
    %23 = vector.broadcast %22 : vector<16x1xf32> to vector<16x128xf32>
    %24 = arith.mulf %14, %23 : vector<16x128xf32>
    %c1 = arith.constant 1 : index
    %c0_11 = arith.constant 0 : index
    %25 = vector.load %arg3[%c1, %c0_11] : memref<4x128xf32, #tpu.memory_space<vmem>>, vector<1x128xf32>
    %26 = vector.broadcast %25 : vector<1x128xf32> to vector<16x128xf32>
    %27 = arith.mulf %24, %26 : vector<16x128xf32>
    %c2 = arith.constant 2 : index
    %c0_12 = arith.constant 0 : index
    %28 = vector.load %arg3[%c2, %c0_12] : memref<4x128xf32, #tpu.memory_space<vmem>>, vector<1x128xf32>
    %29 = vector.broadcast %28 : vector<1x128xf32> to vector<16x128xf32>
    %30 = arith.addf %27, %29 : vector<16x128xf32>
    %cst_13 = arith.constant 5.000000e-01 : f32
    %31 = vector.broadcast %cst_13 : f32 to vector<16x128xf32>
    %32 = arith.mulf %31, %30 : vector<16x128xf32>
    %cst_14 = arith.constant 0.707106769 : f32
    %33 = vector.broadcast %cst_14 : f32 to vector<16x128xf32>
    %34 = arith.mulf %30, %33 : vector<16x128xf32>
    %35 = math.erf %34 : vector<16x128xf32>
    %cst_15 = arith.constant 1.000000e+00 : f32
    %36 = vector.broadcast %cst_15 : f32 to vector<16x128xf32>
    %37 = arith.addf %36, %35 : vector<16x128xf32>
    %38 = arith.mulf %32, %37 : vector<16x128xf32>
    %39 = arith.truncf %38 : vector<16x128xf32> to vector<16x128xbf16>
    %c0_16 = arith.constant 0 : index
    %c0_17 = arith.constant 0 : index
    %40 = vector.load %arg4[%c0_16, %c0_17] : memref<128x128xbf16, #tpu.memory_space<vmem>>, vector<128x128xbf16>
    %cst_18 = arith.constant dense<0.000000e+00> : vector<16x128xf32>
    %41 = tpu.matmul %39, %40, %cst_18 {dimension_numbers = #tpu.dot_dimension_numbers<[1], [0], [0], [1], [0, 0, 1, 1], [], []>} : vector<16x128xbf16>, vector<128x128xbf16>, vector<16x128xf32> -> vector<16x128xf32>
    %c0_19 = arith.constant 0 : index
    %c0_20 = arith.constant 0 : index
    %42 = vector.load %arg5[%c0_19, %c0_20] : memref<1x128xf32, #tpu.memory_space<vmem>>, vector<1x128xf32>
    %43 = vector.broadcast %42 : vector<1x128xf32> to vector<16x128xf32>
    %44 = arith.addf %41, %43 : vector<16x128xf32>
    %c0_21 = arith.constant 0 : index
    %c0_22 = arith.constant 0 : index
    %45 = vector.load %arg6[%c0_21, %c0_22] : memref<16x128xf32, #tpu.memory_space<vmem>>, vector<16x128xf32>
    tpu.vector_store %arg6[%c0_21, %c0_22], %44 {strides = array<i32>} : memref<16x128xf32, #tpu.memory_space<vmem>>, vector<16x128xf32>,
    return
  }
  func.func @transform_0(%arg0: i32) -> (i32, i32) {
    %c0_i32 = arith.constant 0 : i32
    %c0_i32_0 = arith.constant 0 : i32
    return %arg0, %c0_i32 : i32, i32
  }
  func.func @transform_1(%arg0: i32) -> (i32, i32) {
    %c0_i32 = arith.constant 0 : i32
    %c0_i32_0 = arith.constant 0 : i32
    %c0_i32_1 = arith.constant 0 : i32
    return %c0_i32, %c0_i32_0 : i32, i32
  }
  func.func @transform_2(%arg0: i32) -> (i32, i32) {
    %c0_i32 = arith.constant 0 : i32
    %c0_i32_0 = arith.constant 0 : i32
    %c0_i32_1 = arith.constant 0 : i32
    return %c0_i32, %c0_i32_0 : i32, i32
  }
  func.func @transform_3(%arg0: i32) -> (i32, i32) {
    %c0_i32 = arith.constant 0 : i32
    %c0_i32_0 = arith.constant 0 : i32
    %c0_i32_1 = arith.constant 0 : i32
    return %c0_i32, %c0_i32_0 : i32, i32
  }
  func.func @transform_4(%arg0: i32) -> (i32, i32) {
    %c0_i32 = arith.constant 0 : i32
    %c0_i32_0 = arith.constant 0 : i32
    %c0_i32_1 = arith.constant 0 : i32
    return %c0_i32, %c0_i32_0 : i32, i32
  }
  func.func @transform_5(%arg0: i32) -> (i32, i32) {
    %c0_i32 = arith.constant 0 : i32
    %c0_i32_0 = arith.constant 0 : i32
    return %arg0, %c0_i32 : i32, i32
  }
}

</mosaic_0001>

<llo_original>
// kernel: tpu_custom_call.1
$region0: #{tpu_custom_call.1}
  #allocation0 [shape = 'u32[]', space=smem, size = 0x4, offset = 0x4, fixed_abs, tag = 'smem constant byte address 0x4 - core index']
  #allocation1 [shape = 'u32[72,128]{1,0:T(1,128)}', space=vmem, size = 0x9000, scoped, tag = 'internal scratch']
  %s0 = inlined_call_operand.hbm [shape: bf16[16,128], index: 0, kind: input, shape index: {}]
  %s1 = inlined_call_operand.hbm [shape: bf16[128,128], index: 1, kind: input, shape index: {}]
  %s2 = inlined_call_operand.hbm [shape: f32[4,128], index: 2, kind: input, shape index: {}]
  %s3 = inlined_call_operand.hbm [shape: bf16[128,128], index: 3, kind: input, shape index: {}]
  %s4 = inlined_call_operand.vmem [shape: f32[1,128], index: 4, kind: input, shape index: {}]
  %s5 = inlined_call_operand.hbm [shape: f32[16,128], index: 5, kind: output, shape index: {}]
  %s6 = sld [smem:[#allocation0]]
  $region46: #{tpu_custom_call.1} parent=0
    _
  %s8 = ssub.s32 1, %s6
  %s9 = scalar_select 0, %s8, %s6
  $region1: #{tpu_custom_call.1} parent=0
    #allocation2 [shape = 'u8[4096]{0}', space=vmem, size = 0x1000, scoped, tag = 'input window, operand 0, single buffered']
    #allocation3 [shape = 's32[1]{0}', space=sflag, size = 0x4, scoped, tag = 'scoped memory for tpu_custom_call.1']
    #allocation4 [shape = 's32[1]{0}', space=sflag, size = 0x4, scoped, tag = 'scoped memory for tpu_custom_call.1']
    #allocation5 [shape = 'u8[32768]{0}', space=vmem, size = 0x8000, scoped, tag = 'input window, operand 1, single buffered']
    #allocation6 [shape = 's32[1]{0}', space=sflag, size = 0x4, scoped, tag = 'scoped memory for tpu_custom_call.1']
    #allocation7 [shape = 'u8[2048]{0}', space=vmem, size = 0x800, scoped, tag = 'input window, operand 2, single buffered']
    #allocation8 [shape = 'u8[32768]{0}', space=vmem, size = 0x8000, scoped, tag = 'input window, operand 3, single buffered']
    #allocation9 [shape = 's32[1]{0}', space=sflag, size = 0x4, scoped, tag = 'scoped memory for tpu_custom_call.1']
    #allocation10 [shape = 'u8[8192]{0}', space=vmem, size = 0x2000, scoped, tag = 'output window, operand 0, single buffered']
    %10 = vsyncpa [#allocation3], 0
    %11 = vsyncpa [#allocation6], 0
    %12 = vsyncpa [#allocation9], 0
    %13 = vsyncpa [#allocation4], 0
    // Predicated region
    $region2: #{tpu_custom_call.1} parent=1 // pred_check
      _
    $region3: #{tpu_custom_call.1} parent=1 // pred_check_branch
      %15 = sbr.rel (0) target = $region5
    $region4: #{tpu_custom_call.1} parent=1 // pred_region
      %17 = vsyncadd [#allocation3], 0
      %s18 = sshll.u32 %s0, 4
      %s19 = int_to_ptr.hbm [resolvable:$true] %s18
      %s20 = sshll.u32 [#allocation2], 4
      %s21 = int_to_ptr.vmem [resolvable:$true] %s20
      %26 = dma.hbm_to_vmem [thread:$0]  %s19, 128, %s21, [#allocation3], 64, 64, 4
    $region5: #{tpu_custom_call.1} parent=1 // pred_fallthru
      _
    // Predicated region
    $region6: #{tpu_custom_call.1} parent=1 // pred_check
      _
    $region7: #{tpu_custom_call.1} parent=1 // pred_check_branch
      %28 = sbr.rel (0) target = $region9
    $region8: #{tpu_custom_call.1} parent=1 // pred_region
      %30 = vsyncadd [#allocation6], 0
      %s31 = sshll.u32 %s1, 4
      %s32 = int_to_ptr.hbm [resolvable:$true] %s31
      %s33 = sshll.u32 [#allocation5], 4
      %s34 = int_to_ptr.vmem [resolvable:$true] %s33
      %39 = dma.hbm_to_vmem [thread:$0]  %s32, 1024, %s34, [#allocation6], 64, 64, 4
    $region9: #{tpu_custom_call.1} parent=1 // pred_fallthru
      _
    // Predicated region
    $region10: #{tpu_custom_call.1} parent=1 // pred_check
      _
    $region11: #{tpu_custom_call.1} parent=1 // pred_check_branch
      %41 = sbr.rel (0) target = $region13
    $region12: #{tpu_custom_call.1} parent=1 // pred_region
      %43 = vsyncadd [#allocation6], 0
      %s45 = sshll.u32 %s2, 4
      %s46 = int_to_ptr.hbm [resolvable:$true] %s45
      %s47 = sshll.u32 [#allocation7], 4
      %s48 = int_to_ptr.vmem [resolvable:$true] %s47
      %50 = dma.hbm_to_vmem [thread:$0]  %s46, 64, %s48, [#allocation6]
    $region13: #{tpu_custom_call.1} parent=1 // pred_fallthru
      _
    // Predicated region
    $region14: #{tpu_custom_call.1} parent=1 // pred_check
      _
    $region15: #{tpu_custom_call.1} parent=1 // pred_check_branch
      %52 = sbr.rel (0) target = $region17
    $region16: #{tpu_custom_call.1} parent=1 // pred_region
      %54 = vsyncadd [#allocation9], 0
      %s55 = sshll.u32 %s3, 4
      %s56 = int_to_ptr.hbm [resolvable:$true] %s55
      %s57 = sshll.u32 [#allocation8], 4
      %s58 = int_to_ptr.vmem [resolvable:$true] %s57
      %63 = dma.hbm_to_vmem [thread:$0]  %s56, 1024, %s58, [#allocation9], 64, 64, 4
    $region17: #{tpu_custom_call.1} parent=1 // pred_fallthru
      _
    // Predicated region
    $region18: #{tpu_custom_call.1} parent=1 // pred_check
      _
    $region19: #{tpu_custom_call.1} parent=1 // pred_check_branch
      %65 = sbr.rel (0) target = $region21
    $region20: #{tpu_custom_call.1} parent=1 // pred_region
      _
    $region21: #{tpu_custom_call.1} parent=1 // pred_fallthru
      _
    // Predicated region
    $region22: #{tpu_custom_call.1} parent=1 // pred_check
      _
    $region23: #{tpu_custom_call.1} parent=1 // pred_check_branch
      %67 = sbr.rel (0) target = $region25
    $region24: #{tpu_custom_call.1} parent=1 // pred_region
      %69 = dma.done [#allocation3], 128
    $region25: #{tpu_custom_call.1} parent=1 // pred_fallthru
      _
    // Predicated region
    $region26: #{tpu_custom_call.1} parent=1 // pred_check
      _
    $region27: #{tpu_custom_call.1} parent=1 // pred_check_branch
      %71 = sbr.rel (0) target = $region29
    $region28: #{tpu_custom_call.1} parent=1 // pred_region
      %73 = dma.done [#allocation6], 1024
    $region29: #{tpu_custom_call.1} parent=1 // pred_fallthru
      _
    // Predicated region
    $region30: #{tpu_custom_call.1} parent=1 // pred_check
      _
    $region31: #{tpu_custom_call.1} parent=1 // pred_check_branch
      %75 = sbr.rel (0) target = $region33
    $region32: #{tpu_custom_call.1} parent=1 // pred_region
      %77 = dma.done [#allocation6], 64
    $region33: #{tpu_custom_call.1} parent=1 // pred_fallthru
      _
    // Predicated region
    $region34: #{tpu_custom_call.1} parent=1 // pred_check
      _
    $region35: #{tpu_custom_call.1} parent=1 // pred_check_branch
      %79 = sbr.rel (0) target = $region37
    $region36: #{tpu_custom_call.1} parent=1 // pred_region
      %81 = dma.done [#allocation9], 1024
    $region37: #{tpu_custom_call.1} parent=1 // pred_fallthru
      _
    %v82 = vld [vmem:[#allocation2] sm:$0xf]
    %v83 = vld [vmem:[#allocation2 + $0x4] sm:$0xf]
    %v84 = vld [vmem:[#allocation5] sm:$0xf]
    %v85 = vld [vmem:[#allocation5 + $0x4] sm:$0xf]
    %v86 = vld [vmem:[#allocation5 + $0x8] sm:$0xf]
    %v87 = vld [vmem:[#allocation5 + $0xc] sm:$0xf]
    %v88 = vld [vmem:[#allocation5 + $0x10] sm:$0xf]
    %v89 = vld [vmem:[#allocation5 + $0x14] sm:$0xf]
    %v90 = vld [vmem:[#allocation5 + $0x18] sm:$0xf]
    %v91 = vld [vmem:[#allocation5 + $0x1c] sm:$0xf]
    %v92 = vld [vmem:[#allocation5 + $0x20] sm:$0xf]
    %v93 = vld [vmem:[#allocation5 + $0x24] sm:$0xf]
    %v94 = vld [vmem:[#allocation5 + $0x28] sm:$0xf]
    %v95 = vld [vmem:[#allocation5 + $0x2c] sm:$0xf]
    %v96 = vld [vmem:[#allocation5 + $0x30] sm:$0xf]
    %v97 = vld [vmem:[#allocation5 + $0x34] sm:$0xf]
    %v98 = vld [vmem:[#allocation5 + $0x38] sm:$0xf]
    %v99 = vld [vmem:[#allocation5 + $0x3c] sm:$0xf]
    %v100 = vld [vmem:[#allocation7] sm:$0x1]
    %v101 = vperm.slane %v100, 0
    %v104 = vunpack.c.l.b16 %v82
    %v105 = vunpack.c.l.b16 %v83
    %v106 = vpack.c.b16 %v105, %v104
    %v124 = vunpack.c.l.b16 %v84
    %v125 = vunpack.c.l.b16 %v85
    %v126 = vunpack.c.l.b16 %v86
    %v127 = vunpack.c.l.b16 %v87
    %v128 = vunpack.c.l.b16 %v88
    %v129 = vunpack.c.l.b16 %v89
    %v130 = vunpack.c.l.b16 %v90
    %v131 = vunpack.c.l.b16 %v91
    %v132 = vunpack.c.l.b16 %v92
    %v133 = vunpack.c.l.b16 %v93
    %v134 = vunpack.c.l.b16 %v94
    %v135 = vunpack.c.l.b16 %v95
    %v136 = vunpack.c.l.b16 %v96
    %v137 = vunpack.c.l.b16 %v97
    %v138 = vunpack.c.l.b16 %v98
    %v139 = vunpack.c.l.b16 %v99
    %v140 = vpack.c.b16 %v125, %v124
    %v141 = vpack.c.b16 %v127, %v126
    %v142 = vpack.c.b16 %v129, %v128
    %v143 = vpack.c.b16 %v131, %v130
    %v144 = vpack.c.b16 %v133, %v132
    %v145 = vpack.c.b16 %v135, %v134
    %v146 = vpack.c.b16 %v137, %v136
    %v147 = vpack.c.b16 %v139, %v138
    %156 = vmatpush.bf16.msra.mxu0 %v147
    %157 = vmatpush.bf16.msra.mxu0 %v146
    %158 = vmatpush.bf16.msra.mxu0 %v145
    %159 = vmatpush.bf16.msra.mxu0 %v144
    %160 = vmatpush.bf16.msra.mxu0 %v143
    %161 = vmatpush.bf16.msra.mxu0 %v142
    %162 = vmatpush.bf16.msra.mxu0 %v141
    %163 = vmatpush.bf16.msra.mxu0 %v140
    %164 = vmatmul.bf16.gmra.mxu0 %v106
    %v165 = vpop.f32.mrf.mxu0
    %v166 = vadd.f32 %v101, %v165
    %v167 = vpop.f32.mrf.mxu0
    %v168 = vadd.f32 %v101, %v167
    %169 = vdwg.mxu0
    %170 = vadd.xlane.f32.xlu0 %v166
    %v171 = vpop.xlane.xlu0 %170
    %172 = vadd.xlane.f32.xlu0 %v168
    %v173 = vpop.xlane.xlu0 %172
    %v174 = vmul.f32 %v171, 0.015625
    %v175 = vmul.f32 %v173, 0.015625
    %v176 = vsub.f32 %v166, %v174
    %v177 = vsub.f32 %v168, %v175
    %v178 = vld [vmem:[#allocation7 + $0x3] sm:$0x1]
    %v179 = vperm.slane %v178, 0
    %v180 = vmul.f32 %v176, %v179
    %v181 = vmul.f32 %v177, %v179
    %v182 = vmul.f32 %v180, %v180
    %v183 = vmul.f32 %v181, %v181
    %184 = vadd.xlane.f32.xlu0 %v182
    %v185 = vpop.xlane.xlu0 %184
    %186 = vadd.xlane.f32.xlu0 %v183
    %v187 = vpop.xlane.xlu0 %186
    %v188 = vmul.f32 %v185, 0.015625
    %v189 = vmul.f32 %v187, 0.015625
    %v190 = vadd.f32 %v188, 1e-05
    %v191 = vadd.f32 %v189, 1e-05
    %v192 = vrsqrt.pop %v190
    %v193 = vmul.f32 %v192, %v190
    %v194 = vmul.f32 %v193, %v192
    %v195 = vmul.f32 0.5, %v194
    %v196 = vsub.f32 1.5, %v195
    %v197 = vmul.f32 %v192, %v196
    %vm198 = vweird.f32 %v190
    %vm199 = vweird.f32 %v192
    %vm200 = vmor %vm198, %vm199
    %v201 = vsel %vm200, %v192, %v197
    %v202 = vrsqrt.pop %v191
    %v203 = vmul.f32 %v202, %v191
    %v204 = vmul.f32 %v203, %v202
    %v205 = vmul.f32 0.5, %v204
    %v206 = vsub.f32 1.5, %v205
    %v207 = vmul.f32 %v202, %v206
    %vm208 = vweird.f32 %v191
    %vm209 = vweird.f32 %v202
    %vm210 = vmor %vm208, %vm209
    %v211 = vsel %vm210, %v202, %v207
    %v212 = vmul.f32 %v180, %v201
    %v213 = vmul.f32 %v181, %v211
    %v214 = vld [vmem:[#allocation7 + $0x1] sm:$0x1]
    %v215 = vperm.slane %v214, 0
    %v216 = vmul.f32 %v212, %v215
    %v217 = vmul.f32 %v213, %v215
    %v218 = vld [vmem:[#allocation7 + $0x2] sm:$0x1]
    %v219 = vperm.slane %v218, 0
    %v220 = vadd.f32 %v216, %v219
    %v221 = vadd.f32 %v217, %v219
    %v222 = vmul.f32 %v220, 0.5
    %v223 = vmul.f32 %v221, 0.5
    %v224 = vmul.f32 %v220, 0.70710677
    %v225 = vmul.f32 %v221, 0.70710677
    %v226 = vmul.f32 %v224, %v224
    %v227 = vmin.f32 16.0, %v226
    %v228 = vmul.f32 %v227, 2.1237322e-06
    %v229 = vadd.f32 %v228, 0.00028619796
    %v230 = vmul.f32 %v227, %v229
    %v231 = vadd.f32 %v230, 0.0036580483
    %v232 = vmul.f32 %v227, %v231
    %v233 = vadd.f32 %v232, 0.05243302
    %v234 = vmul.f32 %v227, %v233
    %v235 = vadd.f32 %v234, 0.18741608
    %v236 = vmul.f32 %v227, %v235
    %v237 = vadd.f32 %v236, 1.1283791
    %v238 = vmul.f32 %v224, %v237
    %v239 = vmul.f32 %v227, 3.8918573e-05
    %v240 = vadd.f32 %v239, 0.001143296
    %v241 = vmul.f32 %v227, %v240
    %v242 = vadd.f32 %v241, 0.014752088
    %v243 = vmul.f32 %v227, %v242
    %v244 = vadd.f32 %v243, 0.112945676
    %v245 = vmul.f32 %v227, %v244
    %v246 = vadd.f32 %v245, 0.4994258
    %v247 = vmul.f32 %v227, %v246
    %v248 = vadd.f32 %v247, 1.0
    %v249 = vrcp.pop %v248
    %v250 = vmul.f32 %v248, %v249
    %v251 = vsub.f32 1.0, %v250
    %v252 = vmul.f32 %v249, %v251
    %v253 = vadd.f32 %v249, %v252
    %vm254 = vweird.f32 %v248
    %vm255 = vweird.f32 %v249
    %vm256 = vmor %vm254, %vm255
    %v257 = vsel %vm256, %v249, %v253
    %v258 = vand.u32 2147483647, %v248
    %vm259 = vcmp.eq.f32.partialorder %v258, 8.507059e+37
    %v260 = vand.u32 %v248, 2147483648
    %v261 = vor.u32 1.1754944e-38, %v260
    %v262 = vsel %vm259, %v261, %v257
    %v263 = vmul.f32 %v238, %v262
    %v264 = vmin.f32 %v263, 1.0
    %v265 = vmax.f32 %v264, -1.0
    %v266 = vmul.f32 %v225, %v225
    %v267 = vmin.f32 16.0, %v266
    %v268 = vmul.f32 %v267, 2.1237322e-06
    %v269 = vadd.f32 %v268, 0.00028619796
    %v270 = vmul.f32 %v267, %v269
    %v271 = vadd.f32 %v270, 0.0036580483
    %v272 = vmul.f32 %v267, %v271
    %v273 = vadd.f32 %v272, 0.05243302
    %v274 = vmul.f32 %v267, %v273
    %v275 = vadd.f32 %v274, 0.18741608
    %v276 = vmul.f32 %v267, %v275
    %v277 = vadd.f32 %v276, 1.1283791
    %v278 = vmul.f32 %v225, %v277
    %v279 = vmul.f32 %v267, 3.8918573e-05
    %v280 = vadd.f32 %v279, 0.001143296
    %v281 = vmul.f32 %v267, %v280
    %v282 = vadd.f32 %v281, 0.014752088
    %v283 = vmul.f32 %v267, %v282
    %v284 = vadd.f32 %v283, 0.112945676
    %v285 = vmul.f32 %v267, %v284
    %v286 = vadd.f32 %v285, 0.4994258
    %v287 = vmul.f32 %v267, %v286
    %v288 = vadd.f32 %v287, 1.0
    %v289 = vrcp.pop %v288
    %v290 = vmul.f32 %v288, %v289
    %v291 = vsub.f32 1.0, %v290
    %v292 = vmul.f32 %v289, %v291
    %v293 = vadd.f32 %v289, %v292
    %vm294 = vweird.f32 %v288
    %vm295 = vweird.f32 %v289
    %vm296 = vmor %vm294, %vm295
    %v297 = vsel %vm296, %v289, %v293
    %v298 = vand.u32 2147483647, %v288
    %vm299 = vcmp.eq.f32.partialorder %v298, 8.507059e+37
    %v300 = vand.u32 %v288, 2147483648
    %v301 = vor.u32 1.1754944e-38, %v300
    %v302 = vsel %vm299, %v301, %v297
    %v303 = vmul.f32 %v278, %v302
    %v304 = vmin.f32 %v303, 1.0
    %v305 = vmax.f32 %v304, -1.0
    %v306 = vadd.f32 %v265, 1.0
    %v307 = vadd.f32 %v305, 1.0
    %v308 = vmul.f32 %v222, %v306
    %v309 = vmul.f32 %v223, %v307
    %v310 = vpack.c.bf16 %v309, %v308
    %v311 = vld [vmem:[#allocation8] sm:$0xf]
    %v312 = vld [vmem:[#allocation8 + $0x4] sm:$0xf]
    %v313 = vld [vmem:[#allocation8 + $0x8] sm:$0xf]
    %v314 = vld [vmem:[#allocation8 + $0xc] sm:$0xf]
    %v315 = vld [vmem:[#allocation8 + $0x10] sm:$0xf]
    %v316 = vld [vmem:[#allocation8 + $0x14] sm:$0xf]
    %v317 = vld [vmem:[#allocation8 + $0x18] sm:$0xf]
    %v318 = vld [vmem:[#allocation8 + $0x1c] sm:$0xf]
    %v319 = vld [vmem:[#allocation8 + $0x20] sm:$0xf]
    %v320 = vld [vmem:[#allocation8 + $0x24] sm:$0xf]
    %v321 = vld [vmem:[#allocation8 + $0x28] sm:$0xf]
    %v322 = vld [vmem:[#allocation8 + $0x2c] sm:$0xf]
    %v323 = vld [vmem:[#allocation8 + $0x30] sm:$0xf]
    %v324 = vld [vmem:[#allocation8 + $0x34] sm:$0xf]
    %v325 = vld [vmem:[#allocation8 + $0x38] sm:$0xf]
    %v326 = vld [vmem:[#allocation8 + $0x3c] sm:$0xf]
    %v327 = vld [vmem:[%s4] sm:$0x1]
    %v329 = vperm.slane %v327, 0
    %v347 = vunpack.c.l.b16 %v311
    %v348 = vunpack.c.l.b16 %v312
    %v349 = vunpack.c.l.b16 %v313
    %v350 = vunpack.c.l.b16 %v314
    %v351 = vunpack.c.l.b16 %v315
    %v352 = vunpack.c.l.b16 %v316
    %v353 = vunpack.c.l.b16 %v317
    %v354 = vunpack.c.l.b16 %v318
    %v355 = vunpack.c.l.b16 %v319
    %v356 = vunpack.c.l.b16 %v320
    %v357 = vunpack.c.l.b16 %v321
    %v358 = vunpack.c.l.b16 %v322
    %v359 = vunpack.c.l.b16 %v323
    %v360 = vunpack.c.l.b16 %v324
    %v361 = vunpack.c.l.b16 %v325
    %v362 = vunpack.c.l.b16 %v326
    %v363 = vpack.c.b16 %v348, %v347
    %v364 = vpack.c.b16 %v350, %v349
    %v365 = vpack.c.b16 %v352, %v351
    %v366 = vpack.c.b16 %v354, %v353
    %v367 = vpack.c.b16 %v356, %v355
    %v368 = vpack.c.b16 %v358, %v357
    %v369 = vpack.c.b16 %v360, %v359
    %v370 = vpack.c.b16 %v362, %v361
    %379 = vmatpush.bf16.msra.mxu0 %v370
    %380 = vmatpush.bf16.msra.mxu0 %v369
    %381 = vmatpush.bf16.msra.mxu0 %v368
    %382 = vmatpush.bf16.msra.mxu0 %v367
    %383 = vmatpush.bf16.msra.mxu0 %v366
    %384 = vmatpush.bf16.msra.mxu0 %v365
    %385 = vmatpush.bf16.msra.mxu0 %v364
    %386 = vmatpush.bf16.msra.mxu0 %v363
    %387 = vmatmul.bf16.gmra.mxu0 %v310
    %v388 = vpop.f32.mrf.mxu0
    %v389 = vadd.f32 %v329, %v388
    %v390 = vpop.f32.mrf.mxu0
    %v391 = vadd.f32 %v329, %v390
    %392 = vdwg.mxu0
    %393 = vst [vmem:[#allocation10] sm:$0xff] %v389
    %394 = vst [vmem:[#allocation10 + $0x8] sm:$0xff] %v391
    // Predicated region
    $region38: #{tpu_custom_call.1} parent=1 // pred_check
      _
    $region39: #{tpu_custom_call.1} parent=1 // pred_check_branch
      %396 = sbr.rel (0) target = $region41
    $region40: #{tpu_custom_call.1} parent=1 // pred_region
      %398 = vsyncadd [#allocation4], 0
      %s399 = sshll.u32 [#allocation10], 4
      %s400 = int_to_ptr.vmem [resolvable:$true] %s399
      %s401 = sshll.u32 %s5, 4
      %s402 = int_to_ptr.hbm [resolvable:$true] %s401
      %407 = dma.vmem_to_hbm [thread:$0]  %s400, 256, %s402, [#allocation4], 128, 128, 8
    $region41: #{tpu_custom_call.1} parent=1 // pred_fallthru
      _
    // Predicated region
    $region42: #{tpu_custom_call.1} parent=1 // pred_check
      _
    $region43: #{tpu_custom_call.1} parent=1 // pred_check_branch
      %409 = sbr.rel (0) target = $region45
    $region44: #{tpu_custom_call.1} parent=1 // pred_region
      %411 = dma.done [#allocation4], 256
    $region45: #{tpu_custom_call.1} parent=1 // pred_fallthru
      _
    %412 = vsyncpa [#allocation3], 1
    %413 = vsyncpa [#allocation6], 1
    %414 = vsyncpa [#allocation9], 1
    %415 = vsyncpa [#allocation4], 1

</llo_original>
